<compile_context>
chip_gen: v5e
topology: v5e:2x2
jax: 0.10.0
libtpu: 0.0.40
codegen_flags: <defaults>
</compile_context>

<pallas_src>
import numpy as np
import jax
import jax.numpy as jnp
from jax.experimental import pallas as pl
from jax.experimental.pallas import tpu as pltpu


# ---------------------------------------------------------------------------
# host-side helpers (plain numpy glue, run once per spatial shape)
# ---------------------------------------------------------------------------
def _adaptive_pool_matrix(in_size, out_size):
    """Rows of averaging weights replicating nn.AdaptiveAvgPool2d bins."""
    m = np.zeros((out_size, in_size), dtype=np.float32)
    for i in range(out_size):
        start = (i * in_size) // out_size
        end = int(np.ceil((i + 1) * in_size / out_size))
        m[i, start:end] = 1.0 / (end - start)
    return m


def _bilinear_matrix(in_size, out_size):
    """F.interpolate(mode='bilinear', align_corners=True) weights, 1-D."""
    m = np.zeros((out_size, in_size), dtype=np.float32)
    if in_size == 1:
        m[:, 0] = 1.0
        return m
    for p in range(out_size):
        coord = p * (in_size - 1) / (out_size - 1) if out_size > 1 else 0.0
        i0 = min(int(np.floor(coord)), in_size - 1)
        i1 = min(i0 + 1, in_size - 1)
        frac = coord - i0
        m[p, i0] += 1.0 - frac
        m[p, i1] += frac
    return m


# 3x3 conv tap offsets, row-major; tap t <-> (kh, kw) = (dh+1, dw+1)
_OFFSETS = [(-1, -1), (-1, 0), (-1, 1),
            (0, -1), (0, 0), (0, 1),
            (1, -1), (1, 0), (1, 1)]


# ---------------------------------------------------------------------------
# fused kernel: 3 pyramid branches + sum + 3x3 conv + BN(bias) + ReLU
# ---------------------------------------------------------------------------
def _make_fam_kernel(Cout, Ho, Wo):
    HW = Ho * Wo

    def kernel(x_ref, p_ref, u_ref, w1_ref, b1_ref, sel_ref,
               wout_ref, bout_ref, tap_ref, o_ref):
        x2d = x_ref[0]                                      # (Cin, Hin*Win) bf16

        # one pool matmul covering all three branches (concatenated lanes)
        pooled = jnp.dot(x2d, p_ref[...],
                         preferred_element_type=jnp.float32)         # (Cin, S)

        # all three folded 1x1 convs in one matmul; bias + ReLU in f32
        z_all = jnp.dot(w1_ref[...], pooled.astype(jnp.bfloat16),
                        preferred_element_type=jnp.float32)          # (3*Cout, S)
        z_all = jnp.maximum(z_all + b1_ref[...], 0.0)

        # keep branch-b rows only on branch-b lanes (disjoint lane masks)
        z_cat = (z_all[0:Cout] * sel_ref[0]
                 + z_all[Cout:2 * Cout] * sel_ref[1]
                 + z_all[2 * Cout:3 * Cout] * sel_ref[2])             # (Cout, S)

        # one upsample matmul that directly produces the branch sum
        up = jnp.dot(z_cat.astype(jnp.bfloat16), u_ref[...],
                     preferred_element_type=jnp.float32)              # (Cout, HW)

        # 3x3 'same' conv (bias folded from BN) + ReLU via roll-based im2col
        cols = []
        for t, (dh, dw) in enumerate(_OFFSETS):
            shift = (-(dh * Wo + dw)) % HW
            r = up if shift == 0 else pltpu.roll(up, shift=shift, axis=1)
            cols.append(r * tap_ref[t])                               # (Cout, HW)
        col = jnp.concatenate(cols, axis=0).astype(jnp.bfloat16)      # (9*Cout, HW)
        conv = jnp.dot(wout_ref[...], col,
                       preferred_element_type=jnp.float32)            # (Cout, HW)
        o_ref[0] = jnp.maximum(conv + bout_ref[...], 0.0)

    return kernel


# ---------------------------------------------------------------------------
# FAM module wrapper
# ---------------------------------------------------------------------------
class FAMPallas:
    def __init__(self, in_channels, out_channels, size, size1, size2, size3,
                 key):
        self.size = tuple(size) if isinstance(size, (tuple, list)) else (size, size)
        self.sizes = [tuple(s) if isinstance(s, (tuple, list)) else (s, s)
                      for s in (size1, size2, size3)]
        self.in_channels = in_channels
        self.out_channels = out_channels
        eps = 1e-5

        ks = jax.random.split(key, 8)

        def conv1x1(k):
            return (jax.random.normal(k, (out_channels, in_channels),
                                      jnp.float32) / np.sqrt(in_channels))

        def bn(k):
            g = 1.0 + 0.1 * jax.random.normal(k, (out_channels,), jnp.float32)
            b = 0.1 * jax.random.normal(jax.random.fold_in(k, 1),
                                        (out_channels,), jnp.float32)
            scale = g / np.sqrt(1.0 + eps)   # running_var = 1
            bias = b                         # running_mean = 0
            return scale, bias

        # branch 1x1 convs with BN scale folded; row-stacked into one matrix.
        w_list, b_list = [], []
        for i in range(3):
            w = conv1x1(ks[i])
            sc, bi = bn(ks[4 + i])
            w_list.append(w * sc[:, None])
            b_list.append(bi)
        self.w1_rows = jnp.concatenate(w_list, axis=0).astype(jnp.bfloat16)  # (3*Cout, Cin)
        self.b1_rows = jnp.concatenate(b_list)[:, None]                      # (3*Cout, 1) f32

        # 3x3 output conv (bias=False) with BN scale folded; repacked as
        # (Cout, 9*Cout):  wout[o, t*Cout + c] = scale[o] * W[o, c, kh_t, kw_t]
        w3 = (jax.random.normal(ks[3],
                                (out_channels, out_channels, 3, 3),
                                jnp.float32) / np.sqrt(9 * out_channels))
        sco, bio = bn(ks[7])
        w3 = w3 * sco[:, None, None, None]
        w3 = jnp.transpose(w3, (0, 2, 3, 1)).reshape(out_channels,
                                                     9 * out_channels)
        self.wout = w3.astype(jnp.bfloat16)   # (Cout, 9*Cout)
        self.bout = bio[:, None]              # (Cout, 1) f32

        self._fn_cache = {}                   # (H, W) -> jitted forward

    # ---- constants that depend on the input spatial size (built once) ------
    def _build_consts(self, H, W):
        Ho, Wo = self.size
        HWin, HWout = H * W, Ho * Wo
        S = sum(sh * sw for (sh, sw) in self.sizes)

        p_cat = np.zeros((HWin, S), np.float32)
        u_cat = np.zeros((S, HWout), np.float32)
        sel = np.zeros((3, 1, S), np.float32)
        off = 0
        for b, (sh, sw) in enumerate(self.sizes):
            n = sh * sw
            pk = np.kron(_adaptive_pool_matrix(H, sh),
                         _adaptive_pool_matrix(W, sw))       # (sh*sw, H*W)
            uk = np.kron(_bilinear_matrix(sh, Ho),
                         _bilinear_matrix(sw, Wo))           # (Ho*Wo, sh*sw)
            p_cat[:, off:off + n] = pk.T
            u_cat[off:off + n, :] = uk.T
            sel[b, 0, off:off + n] = 1.0
            off += n

        # boundary masks for the roll-based 3x3 'same' conv
        ii, jj = np.meshgrid(np.arange(Ho), np.arange(Wo), indexing='ij')
        tap = np.zeros((9, 1, HWout), np.float32)
        for t, (dh, dw) in enumerate(_OFFSETS):
            valid = ((ii + dh >= 0) & (ii + dh < Ho) &
                     (jj + dw >= 0) & (jj + dw < Wo))
            tap[t, 0] = valid.reshape(-1).astype(np.float32)

        return (jnp.asarray(p_cat, jnp.bfloat16),
                jnp.asarray(u_cat, jnp.bfloat16),
                jnp.asarray(sel),
                jnp.asarray(tap))

    def _build_fn(self, H, W):
        Ho, Wo = self.size
        Cin, Cout = self.in_channels, self.out_channels
        HWin, HWout = H * W, Ho * Wo

        p_cat, u_cat, sel, tap = self._build_consts(H, W)
        params = (p_cat, u_cat, self.w1_rows, self.b1_rows, sel,
                  self.wout, self.bout, tap)

        def full_spec(a):
            nd = a.ndim
            return pl.BlockSpec(a.shape, lambda n, _nd=nd: (0,) * _nd)

        param_specs = [full_spec(a) for a in params]
        kernel = _make_fam_kernel(Cout, Ho, Wo)

        @jax.jit
        def fwd(x):
            N = x.shape[0]
            x2d = x.reshape(N, Cin, HWin).astype(jnp.bfloat16)
            out = pl.pallas_call(
                kernel,
                out_shape=jax.ShapeDtypeStruct((N, Cout, HWout), jnp.float32),
                grid=(N,),
                in_specs=[pl.BlockSpec((1, Cin, HWin), lambda n: (n, 0, 0))]
                         + param_specs,
                out_specs=pl.BlockSpec((1, Cout, HWout), lambda n: (n, 0, 0)),
                compiler_params=pltpu.CompilerParams(
                    dimension_semantics=("parallel",)),
            )(x2d, *params)
            return out.reshape(N, Cout, Ho, Wo)

        return fwd

    def __call__(self, x):
        H, W = x.shape[2], x.shape[3]
        fn = self._fn_cache.get((H, W))
        if fn is None:
            fn = self._build_fn(H, W)
            self._fn_cache[(H, W)] = fn
        return fn(x)


if __name__ == "__main__":
    key = jax.random.PRNGKey(0)
    kx, kp = jax.random.split(key)

    N, Cin, Cout, H, W = 2, 8, 8, 16, 16
    x = jax.random.normal(kx, (N, Cin, H, W), dtype=jnp.float32)

    fam = FAMPallas(in_channels=Cin, out_channels=Cout,
                    size=(H, W), size1=2, size2=4, size3=8, key=kp)
    y = fam(x)          # first call: build constants, trace + compile
    y = fam(x)          # cached, jitted fast path (no host work)
    jax.block_until_ready(y)
    assert y.shape == (N, Cout, H, W)
    assert bool(jnp.all(jnp.isfinite(y)))
    print("KERNEL_OK")
</pallas_src>

<mosaic_0001>
module attributes {stable_mosaic.version = 11 : i64} {
  func.func @kernel(%arg0: i32, %arg1: memref<1x8x256xbf16, #tpu.memory_space<vmem>>, %arg2: memref<256x84xbf16, #tpu.memory_space<vmem>>, %arg3: memref<84x256xbf16, #tpu.memory_space<vmem>>, %arg4: memref<24x8xbf16, #tpu.memory_space<vmem>>, %arg5: memref<24x1xf32, #tpu.memory_space<vmem>>, %arg6: memref<3x1x84xf32, #tpu.memory_space<vmem>>, %arg7: memref<8x72xbf16, #tpu.memory_space<vmem>>, %arg8: memref<8x1xf32, #tpu.memory_space<vmem>>, %arg9: memref<9x1x256xf32, #tpu.memory_space<vmem>>, %arg10: memref<1x8x256xf32, #tpu.memory_space<vmem>>) attributes {dimension_semantics = [#tpu.dimension_semantics<parallel>], iteration_bounds = array<i64: 2>, scalar_prefetch = 0 : i64, scratch_operands = 0 : i64, tpu.core_type = #tpu.core_type<tc>, window_params = [{transform_indices = @transform_0, window_bounds = array<i64: 1, 8, 256>}, {pipeline_mode = #tpu.pipeline_mode<synchronous>, transform_indices = @transform_1, window_bounds = array<i64: 256, 84>}, {pipeline_mode = #tpu.pipeline_mode<synchronous>, transform_indices = @transform_2, window_bounds = array<i64: 84, 256>}, {pipeline_mode = #tpu.pipeline_mode<synchronous>, transform_indices = @transform_3, window_bounds = array<i64: 24, 8>}, {pipeline_mode = #tpu.pipeline_mode<synchronous>, transform_indices = @transform_4, window_bounds = array<i64: 24, 1>}, {pipeline_mode = #tpu.pipeline_mode<synchronous>, transform_indices = @transform_5, window_bounds = array<i64: 3, 1, 84>}, {pipeline_mode = #tpu.pipeline_mode<synchronous>, transform_indices = @transform_6, window_bounds = array<i64: 8, 72>}, {pipeline_mode = #tpu.pipeline_mode<synchronous>, transform_indices = @transform_7, window_bounds = array<i64: 8, 1>}, {pipeline_mode = #tpu.pipeline_mode<synchronous>, transform_indices = @transform_8, window_bounds = array<i64: 9, 1, 256>}, {transform_indices = @transform_9, window_bounds = array<i64: 1, 8, 256>}]} {
    %c0 = arith.constant 0 : index
    %c0_0 = arith.constant 0 : index
    %c0_1 = arith.constant 0 : index
    %0 = vector.load %arg1[%c0, %c0_0, %c0_1] : memref<1x8x256xbf16, #tpu.memory_space<vmem>>, vector<1x8x256xbf16>
    %1 = vector.shape_cast %0 : vector<1x8x256xbf16> to vector<8x256xbf16>
    %c0_2 = arith.constant 0 : index
    %c0_3 = arith.constant 0 : index
    %2 = vector.load %arg2[%c0_2, %c0_3] : memref<256x84xbf16, #tpu.memory_space<vmem>>, vector<256x84xbf16>
    %cst = arith.constant dense<0.000000e+00> : vector<8x84xf32>
    %3 = tpu.matmul %1, %2, %cst {dimension_numbers = #tpu.dot_dimension_numbers<[1], [0], [0], [1], [0, 0, 1, 1], [], []>} : vector<8x256xbf16>, vector<256x84xbf16>, vector<8x84xf32> -> vector<8x84xf32>
    %c0_4 = arith.constant 0 : index
    %c0_5 = arith.constant 0 : index
    %4 = vector.load %arg4[%c0_4, %c0_5] : memref<24x8xbf16, #tpu.memory_space<vmem>>, vector<24x8xbf16>
    %5 = arith.truncf %3 : vector<8x84xf32> to vector<8x84xbf16>
    %cst_6 = arith.constant dense<0.000000e+00> : vector<24x84xf32>
    %6 = tpu.matmul %4, %5, %cst_6 {dimension_numbers = #tpu.dot_dimension_numbers<[1], [0], [0], [1], [0, 0, 1, 1], [], []>} : vector<24x8xbf16>, vector<8x84xbf16>, vector<24x84xf32> -> vector<24x84xf32>
    %c0_7 = arith.constant 0 : index
    %c0_8 = arith.constant 0 : index
    %7 = vector.load %arg5[%c0_7, %c0_8] : memref<24x1xf32, #tpu.memory_space<vmem>>, vector<24x1xf32>
    %8 = vector.broadcast %7 : vector<24x1xf32> to vector<24x84xf32>
    %9 = arith.addf %6, %8 : vector<24x84xf32>
    %cst_9 = arith.constant 0.000000e+00 : f32
    %10 = vector.broadcast %cst_9 : f32 to vector<24x84xf32>
    %11 = arith.maximumf %9, %10 : vector<24x84xf32>
    %12 = vector.extract_strided_slice %11 {offsets = [0, 0], sizes = [8, 84], strides = [1, 1]} : vector<24x84xf32> to vector<8x84xf32>
    %c0_10 = arith.constant 0 : index
    %c0_11 = arith.constant 0 : index
    %c0_12 = arith.constant 0 : index
    %13 = vector.load %arg6[%c0_10, %c0_11, %c0_12] : memref<3x1x84xf32, #tpu.memory_space<vmem>>, vector<1x1x84xf32>
    %14 = vector.shape_cast %13 : vector<1x1x84xf32> to vector<1x84xf32>
    %15 = vector.broadcast %14 : vector<1x84xf32> to vector<8x84xf32>
    %16 = arith.mulf %12, %15 : vector<8x84xf32>
    %17 = vector.extract_strided_slice %11 {offsets = [8, 0], sizes = [8, 84], strides = [1, 1]} : vector<24x84xf32> to vector<8x84xf32>
    %c1 = arith.constant 1 : index
    %c0_13 = arith.constant 0 : index
    %c0_14 = arith.constant 0 : index
    %18 = vector.load %arg6[%c1, %c0_13, %c0_14] : memref<3x1x84xf32, #tpu.memory_space<vmem>>, vector<1x1x84xf32>
    %19 = vector.shape_cast %18 : vector<1x1x84xf32> to vector<1x84xf32>
    %20 = vector.broadcast %19 : vector<1x84xf32> to vector<8x84xf32>
    %21 = arith.mulf %17, %20 : vector<8x84xf32>
    %22 = arith.addf %16, %21 : vector<8x84xf32>
    %23 = vector.extract_strided_slice %11 {offsets = [16, 0], sizes = [8, 84], strides = [1, 1]} : vector<24x84xf32> to vector<8x84xf32>
    %c2 = arith.constant 2 : index
    %c0_15 = arith.constant 0 : index
    %c0_16 = arith.constant 0 : index
    %24 = vector.load %arg6[%c2, %c0_15, %c0_16] : memref<3x1x84xf32, #tpu.memory_space<vmem>>, vector<1x1x84xf32>
    %25 = vector.shape_cast %24 : vector<1x1x84xf32> to vector<1x84xf32>
    %26 = vector.broadcast %25 : vector<1x84xf32> to vector<8x84xf32>
    %27 = arith.mulf %23, %26 : vector<8x84xf32>
    %28 = arith.addf %22, %27 : vector<8x84xf32>
    %29 = arith.truncf %28 : vector<8x84xf32> to vector<8x84xbf16>
    %c0_17 = arith.constant 0 : index
    %c0_18 = arith.constant 0 : index
    %30 = vector.load %arg3[%c0_17, %c0_18] : memref<84x256xbf16, #tpu.memory_space<vmem>>, vector<84x256xbf16>
    %cst_19 = arith.constant dense<0.000000e+00> : vector<8x256xf32>
    %31 = tpu.matmul %29, %30, %cst_19 {dimension_numbers = #tpu.dot_dimension_numbers<[1], [0], [0], [1], [0, 0, 1, 1], [], []>} : vector<8x84xbf16>, vector<84x256xbf16>, vector<8x256xf32> -> vector<8x256xf32>
    %c17_i32 = arith.constant 17 : i32
    %32 = tpu.dynamic_rotate %31 by %c17_i32 dim 1 : vector<8x256xf32>, i32 -> vector<8x256xf32>
    %c0_20 = arith.constant 0 : index
    %c0_21 = arith.constant 0 : index
    %c0_22 = arith.constant 0 : index
    %33 = vector.load %arg9[%c0_20, %c0_21, %c0_22] : memref<9x1x256xf32, #tpu.memory_space<vmem>>, vector<1x1x256xf32>
    %34 = vector.shape_cast %33 : vector<1x1x256xf32> to vector<1x256xf32>
    %35 = vector.broadcast %34 : vector<1x256xf32> to vector<8x256xf32>
    %36 = arith.mulf %32, %35 : vector<8x256xf32>
    %c16_i32 = arith.constant 16 : i32
    %37 = tpu.dynamic_rotate %31 by %c16_i32 dim 1 : vector<8x256xf32>, i32 -> vector<8x256xf32>
    %c1_23 = arith.constant 1 : index
    %c0_24 = arith.constant 0 : index
    %c0_25 = arith.constant 0 : index
    %38 = vector.load %arg9[%c1_23, %c0_24, %c0_25] : memref<9x1x256xf32, #tpu.memory_space<vmem>>, vector<1x1x256xf32>
    %39 = vector.shape_cast %38 : vector<1x1x256xf32> to vector<1x256xf32>
    %40 = vector.broadcast %39 : vector<1x256xf32> to vector<8x256xf32>
    %41 = arith.mulf %37, %40 : vector<8x256xf32>
    %c15_i32 = arith.constant 15 : i32
    %42 = tpu.dynamic_rotate %31 by %c15_i32 dim 1 : vector<8x256xf32>, i32 -> vector<8x256xf32>
    %c2_26 = arith.constant 2 : index
    %c0_27 = arith.constant 0 : index
    %c0_28 = arith.constant 0 : index
    %43 = vector.load %arg9[%c2_26, %c0_27, %c0_28] : memref<9x1x256xf32, #tpu.memory_space<vmem>>, vector<1x1x256xf32>
    %44 = vector.shape_cast %43 : vector<1x1x256xf32> to vector<1x256xf32>
    %45 = vector.broadcast %44 : vector<1x256xf32> to vector<8x256xf32>
    %46 = arith.mulf %42, %45 : vector<8x256xf32>
    %c1_i32 = arith.constant 1 : i32
    %47 = tpu.dynamic_rotate %31 by %c1_i32 dim 1 : vector<8x256xf32>, i32 -> vector<8x256xf32>
    %c3 = arith.constant 3 : index
    %c0_29 = arith.constant 0 : index
    %c0_30 = arith.constant 0 : index
    %48 = vector.load %arg9[%c3, %c0_29, %c0_30] : memref<9x1x256xf32, #tpu.memory_space<vmem>>, vector<1x1x256xf32>
    %49 = vector.shape_cast %48 : vector<1x1x256xf32> to vector<1x256xf32>
    %50 = vector.broadcast %49 : vector<1x256xf32> to vector<8x256xf32>
    %51 = arith.mulf %47, %50 : vector<8x256xf32>
    %c4 = arith.constant 4 : index
    %c0_31 = arith.constant 0 : index
    %c0_32 = arith.constant 0 : index
    %52 = vector.load %arg9[%c4, %c0_31, %c0_32] : memref<9x1x256xf32, #tpu.memory_space<vmem>>, vector<1x1x256xf32>
    %53 = vector.shape_cast %52 : vector<1x1x256xf32> to vector<1x256xf32>
    %54 = vector.broadcast %53 : vector<1x256xf32> to vector<8x256xf32>
    %55 = arith.mulf %31, %54 : vector<8x256xf32>
    %c255_i32 = arith.constant 255 : i32
    %56 = tpu.dynamic_rotate %31 by %c255_i32 dim 1 : vector<8x256xf32>, i32 -> vector<8x256xf32>
    %c5 = arith.constant 5 : index
    %c0_33 = arith.constant 0 : index
    %c0_34 = arith.constant 0 : index
    %57 = vector.load %arg9[%c5, %c0_33, %c0_34] : memref<9x1x256xf32, #tpu.memory_space<vmem>>, vector<1x1x256xf32>
    %58 = vector.shape_cast %57 : vector<1x1x256xf32> to vector<1x256xf32>
    %59 = vector.broadcast %58 : vector<1x256xf32> to vector<8x256xf32>
    %60 = arith.mulf %56, %59 : vector<8x256xf32>
    %c241_i32 = arith.constant 241 : i32
    %61 = tpu.dynamic_rotate %31 by %c241_i32 dim 1 : vector<8x256xf32>, i32 -> vector<8x256xf32>
    %c6 = arith.constant 6 : index
    %c0_35 = arith.constant 0 : index
    %c0_36 = arith.constant 0 : index
    %62 = vector.load %arg9[%c6, %c0_35, %c0_36] : memref<9x1x256xf32, #tpu.memory_space<vmem>>, vector<1x1x256xf32>
    %63 = vector.shape_cast %62 : vector<1x1x256xf32> to vector<1x256xf32>
    %64 = vector.broadcast %63 : vector<1x256xf32> to vector<8x256xf32>
    %65 = arith.mulf %61, %64 : vector<8x256xf32>
    %c240_i32 = arith.constant 240 : i32
    %66 = tpu.dynamic_rotate %31 by %c240_i32 dim 1 : vector<8x256xf32>, i32 -> vector<8x256xf32>
    %c7 = arith.constant 7 : index
    %c0_37 = arith.constant 0 : index
    %c0_38 = arith.constant 0 : index
    %67 = vector.load %arg9[%c7, %c0_37, %c0_38] : memref<9x1x256xf32, #tpu.memory_space<vmem>>, vector<1x1x256xf32>
    %68 = vector.shape_cast %67 : vector<1x1x256xf32> to vector<1x256xf32>
    %69 = vector.broadcast %68 : vector<1x256xf32> to vector<8x256xf32>
    %70 = arith.mulf %66, %69 : vector<8x256xf32>
    %c239_i32 = arith.constant 239 : i32
    %71 = tpu.dynamic_rotate %31 by %c239_i32 dim 1 : vector<8x256xf32>, i32 -> vector<8x256xf32>
    %c8 = arith.constant 8 : index
    %c0_39 = arith.constant 0 : index
    %c0_40 = arith.constant 0 : index
    %72 = vector.load %arg9[%c8, %c0_39, %c0_40] : memref<9x1x256xf32, #tpu.memory_space<vmem>>, vector<1x1x256xf32>
    %73 = vector.shape_cast %72 : vector<1x1x256xf32> to vector<1x256xf32>
    %74 = vector.broadcast %73 : vector<1x256xf32> to vector<8x256xf32>
    %75 = arith.mulf %71, %74 : vector<8x256xf32>
    %76 = tpu.concatenate %36, %41, %46, %51, %55, %60, %65, %70, %75 in 0 : vector<8x256xf32>, vector<8x256xf32>, vector<8x256xf32>, vector<8x256xf32>, vector<8x256xf32>, vector<8x256xf32>, vector<8x256xf32>, vector<8x256xf32>, vector<8x256xf32> -> vector<72x256xf32>
    %77 = arith.truncf %76 : vector<72x256xf32> to vector<72x256xbf16>
    %c0_41 = arith.constant 0 : index
    %c0_42 = arith.constant 0 : index
    %78 = vector.load %arg7[%c0_41, %c0_42] : memref<8x72xbf16, #tpu.memory_space<vmem>>, vector<8x72xbf16>
    %cst_43 = arith.constant dense<0.000000e+00> : vector<8x256xf32>
    %79 = tpu.matmul %78, %77, %cst_43 {dimension_numbers = #tpu.dot_dimension_numbers<[1], [0], [0], [1], [0, 0, 1, 1], [], []>} : vector<8x72xbf16>, vector<72x256xbf16>, vector<8x256xf32> -> vector<8x256xf32>
    %c0_44 = arith.constant 0 : index
    %c0_45 = arith.constant 0 : index
    %80 = vector.load %arg8[%c0_44, %c0_45] : memref<8x1xf32, #tpu.memory_space<vmem>>, vector<8x1xf32>
    %81 = vector.broadcast %80 : vector<8x1xf32> to vector<8x256xf32>
    %82 = arith.addf %79, %81 : vector<8x256xf32>
    %cst_46 = arith.constant 0.000000e+00 : f32
    %83 = vector.broadcast %cst_46 : f32 to vector<8x256xf32>
    %84 = arith.maximumf %82, %83 : vector<8x256xf32>
    %c0_47 = arith.constant 0 : index
    %c0_48 = arith.constant 0 : index
    %c0_49 = arith.constant 0 : index
    %85 = vector.load %arg10[%c0_47, %c0_48, %c0_49] : memref<1x8x256xf32, #tpu.memory_space<vmem>>, vector<1x8x256xf32>
    %86 = vector.shape_cast %85 : vector<1x8x256xf32> to vector<8x256xf32>
    %87 = vector.shape_cast %84 : vector<8x256xf32> to vector<1x8x256xf32>
    tpu.vector_store %arg10[%c0_47, %c0_48, %c0_49], %87 {strides = array<i32>} : memref<1x8x256xf32, #tpu.memory_space<vmem>>, vector<1x8x256xf32>,
    return
  }
  func.func @transform_0(%arg0: i32) -> (i32, i32, i32) {
    %c0_i32 = arith.constant 0 : i32
    %c0_i32_0 = arith.constant 0 : i32
    %c0_i32_1 = arith.constant 0 : i32
    return %arg0, %c0_i32, %c0_i32_0 : i32, i32, i32
  }
  func.func @transform_1(%arg0: i32) -> (i32, i32) {
    %c0_i32 = arith.constant 0 : i32
    %c0_i32_0 = arith.constant 0 : i32
    %c0_i32_1 = arith.constant 0 : i32
    return %c0_i32, %c0_i32_0 : i32, i32
  }
  func.func @transform_2(%arg0: i32) -> (i32, i32) {
    %c0_i32 = arith.constant 0 : i32
    %c0_i32_0 = arith.constant 0 : i32
    %c0_i32_1 = arith.constant 0 : i32
    return %c0_i32, %c0_i32_0 : i32, i32
  }
  func.func @transform_3(%arg0: i32) -> (i32, i32) {
    %c0_i32 = arith.constant 0 : i32
    %c0_i32_0 = arith.constant 0 : i32
    %c0_i32_1 = arith.constant 0 : i32
    return %c0_i32, %c0_i32_0 : i32, i32
  }
  func.func @transform_4(%arg0: i32) -> (i32, i32) {
    %c0_i32 = arith.constant 0 : i32
    %c0_i32_0 = arith.constant 0 : i32
    %c0_i32_1 = arith.constant 0 : i32
    return %c0_i32, %c0_i32_0 : i32, i32
  }
  func.func @transform_5(%arg0: i32) -> (i32, i32, i32) {
    %c0_i32 = arith.constant 0 : i32
    %c0_i32_0 = arith.constant 0 : i32
    %c0_i32_1 = arith.constant 0 : i32
    %c0_i32_2 = arith.constant 0 : i32
    return %c0_i32, %c0_i32_0, %c0_i32_1 : i32, i32, i32
  }
  func.func @transform_6(%arg0: i32) -> (i32, i32) {
    %c0_i32 = arith.constant 0 : i32
    %c0_i32_0 = arith.constant 0 : i32
    %c0_i32_1 = arith.constant 0 : i32
    return %c0_i32, %c0_i32_0 : i32, i32
  }
  func.func @transform_7(%arg0: i32) -> (i32, i32) {
    %c0_i32 = arith.constant 0 : i32
    %c0_i32_0 = arith.constant 0 : i32
    %c0_i32_1 = arith.constant 0 : i32
    return %c0_i32, %c0_i32_0 : i32, i32
  }
  func.func @transform_8(%arg0: i32) -> (i32, i32, i32) {
    %c0_i32 = arith.constant 0 : i32
    %c0_i32_0 = arith.constant 0 : i32
    %c0_i32_1 = arith.constant 0 : i32
    %c0_i32_2 = arith.constant 0 : i32
    return %c0_i32, %c0_i32_0, %c0_i32_1 : i32, i32, i32
  }
  func.func @transform_9(%arg0: i32) -> (i32, i32, i32) {
    %c0_i32 = arith.constant 0 : i32
    %c0_i32_0 = arith.constant 0 : i32
    %c0_i32_1 = arith.constant 0 : i32
    return %arg0, %c0_i32, %c0_i32_0 : i32, i32, i32
  }
}

</mosaic_0001>

<llo_original>
// kernel: fwd.1
$region0: #{fwd.1}
  #allocation0 [shape = 'u32[]', space=smem, size = 0x4, offset = 0x4, fixed_abs, tag = 'smem constant byte address 0x4 - core index']
  #allocation1 [shape = 'u32[72,128]{1,0:T(1,128)}', space=vmem, size = 0x9000, scoped, tag = 'internal scratch']
  %s0 = inlined_call_operand.vmem [shape: bf16[2,8,256], index: 0, kind: input, shape index: {}]
  %s1 = inlined_call_operand.vmem [shape: bf16[256,84], index: 1, kind: input, shape index: {}]
  %s2 = inlined_call_operand.vmem [shape: bf16[84,256], index: 2, kind: input, shape index: {}]
  %s3 = inlined_call_operand.vmem [shape: bf16[24,8], index: 3, kind: input, shape index: {}]
  %s4 = inlined_call_operand.vmem [shape: f32[24,1], index: 4, kind: input, shape index: {}]
  %s5 = inlined_call_operand.vmem [shape: f32[3,1,84], index: 5, kind: input, shape index: {}]
  %s6 = inlined_call_operand.vmem [shape: bf16[8,72], index: 6, kind: input, shape index: {}]
  %s7 = inlined_call_operand.vmem [shape: f32[8,1], index: 7, kind: input, shape index: {}]
  %s8 = inlined_call_operand.vmem [shape: f32[9,1,256], index: 8, kind: input, shape index: {}]
  %s9 = inlined_call_operand.vmem [shape: f32[2,8,256], index: 9, kind: output, shape index: {}]
  %s10 = sld [smem:[#allocation0]]
  $region69: #{fwd.1} parent=0
    _
  %s12 = ssub.s32 1, %s10
  %s13 = scalar_select 0, %s12, %s10
  loop: start=0, step=1, limit=4
  $region2: #{fwd.1} parent=0 // loop_pre_header
    _
  $region3: #{fwd.1} parent=0 // loop_header
    %s15 = sphi 0, %s19
    %p16 = scmp.ge.s32.totalorder %s15, 4
    %s25 = sphi 0, %s27
    %s28 = sphi 0, %s25
    %s29 = sphi 0, %s28
    %s45 = sphi 0, %s29
    %s49 = sphi 0, %s49
    %s51 = sphi 0, %s49
    %s52 = sphi 0, %s51
    %s66 = sphi 0, %s52
    %s70 = sphi 0, %s70
    %s72 = sphi 0, %s70
    %s73 = sphi 0, %s72
    %s87 = sphi 0, %s73
    %s91 = sphi 0, %s91
    %s93 = sphi 0, %s91
    %s94 = sphi 0, %s93
    %s108 = sphi 0, %s94
    %s112 = sphi 0, %s112
    %s114 = sphi 0, %s112
    %s115 = sphi 0, %s114
    %s129 = sphi 0, %s115
    %s133 = sphi 0, %s133
    %s135 = sphi 0, %s133
    %s136 = sphi 0, %s135
    %s150 = sphi 0, %s136
    %s154 = sphi 0, %s154
    %s156 = sphi 0, %s154
    %s157 = sphi 0, %s156
    %s171 = sphi 0, %s157
    %s175 = sphi 0, %s175
    %s177 = sphi 0, %s175
    %s178 = sphi 0, %s177
    %s192 = sphi 0, %s178
    %s196 = sphi 0, %s196
    %s198 = sphi 0, %s196
    %s199 = sphi 0, %s198
    %s213 = sphi 0, %s199
    %s219 = sphi 0, %s221
    %s222 = sphi 0, %s219
    %s223 = sphi 0, %s222
    %s239 = sphi 0, %s223
  $region4: #{fwd.1} parent=0 // loop_header_branch
    %18 = sbr.rel (%p16) target = $region8
  $region5: #{fwd.1} parent=0 // loop_body
    %s20 = ssub.s32 %s15, 1
    %s21 = ssub.s32 %s15, 2
    %s22 = sadd.s32 %s15, 1
    %s23 = ssub.s32 %s15, %s22
    %p24 = scmp.eq.s32.totalorder %s23, 0
    %s26 = sadd.s32 %s25, 1
    %s27 = scalar_select %p24, %s25, %s26
    %p30 = pneg %p24
    %p31 = scmp.eq.s32.totalorder %s15, 1
    %p32 = por %p30, %p31
    %p33 = scmp.ne.s32.totalorder %s25, %s28
    %p34 = scmp.eq.s32.totalorder %s15, 0
    %p35 = por %p33, %p34
    %p36 = scmp.ne.s32.totalorder %s25, %s28
    %p37 = scmp.eq.s32.totalorder %s20, 1
    %p38 = por %p36, %p37
    %p39 = scmp.ne.s32.totalorder %s28, %s29
    %p40 = scmp.eq.s32.totalorder %s20, 0
    %p41 = por %p39, %p40
    %p42 = scmp.ne.s32.totalorder %s28, %s29
    %p43 = scmp.eq.s32.totalorder %s21, 1
    %p44 = por %p42, %p43
    %p46 = scmp.ne.s32.totalorder %s29, %s45
    %p47 = scmp.eq.s32.totalorder %s21, 0
    %p48 = por %p46, %p47
    %s50 = sadd.s32 %s49, 1
    %p53 = scmp.eq.s32.totalorder %s15, 1
    %p54 = scmp.ne.s32.totalorder %s49, %s51
    %p55 = scmp.eq.s32.totalorder %s15, 0
    %p56 = por %p54, %p55
    %p57 = scmp.ne.s32.totalorder %s49, %s51
    %p58 = scmp.eq.s32.totalorder %s20, 1
    %p59 = por %p57, %p58
    %p60 = scmp.ne.s32.totalorder %s51, %s52
    %p61 = scmp.eq.s32.totalorder %s20, 0
    %p62 = por %p60, %p61
    %p63 = scmp.ne.s32.totalorder %s51, %s52
    %p64 = scmp.eq.s32.totalorder %s21, 1
    %p65 = por %p63, %p64
    %p67 = scmp.ne.s32.totalorder %s52, %s66
    %p68 = scmp.eq.s32.totalorder %s21, 0
    %p69 = por %p67, %p68
    %s71 = sadd.s32 %s70, 1
    %p74 = scmp.eq.s32.totalorder %s15, 1
    %p75 = scmp.ne.s32.totalorder %s70, %s72
    %p76 = scmp.eq.s32.totalorder %s15, 0
    %p77 = por %p75, %p76
    %p78 = scmp.ne.s32.totalorder %s70, %s72
    %p79 = scmp.eq.s32.totalorder %s20, 1
    %p80 = por %p78, %p79
    %p81 = scmp.ne.s32.totalorder %s72, %s73
    %p82 = scmp.eq.s32.totalorder %s20, 0
    %p83 = por %p81, %p82
    %p84 = scmp.ne.s32.totalorder %s72, %s73
    %p85 = scmp.eq.s32.totalorder %s21, 1
    %p86 = por %p84, %p85
    %p88 = scmp.ne.s32.totalorder %s73, %s87
    %p89 = scmp.eq.s32.totalorder %s21, 0
    %p90 = por %p88, %p89
    %s92 = sadd.s32 %s91, 1
    %p95 = scmp.eq.s32.totalorder %s15, 1
    %p96 = scmp.ne.s32.totalorder %s91, %s93
    %p97 = scmp.eq.s32.totalorder %s15, 0
    %p98 = por %p96, %p97
    %p99 = scmp.ne.s32.totalorder %s91, %s93
    %p100 = scmp.eq.s32.totalorder %s20, 1
    %p101 = por %p99, %p100
    %p102 = scmp.ne.s32.totalorder %s93, %s94
    %p103 = scmp.eq.s32.totalorder %s20, 0
    %p104 = por %p102, %p103
    %p105 = scmp.ne.s32.totalorder %s93, %s94
    %p106 = scmp.eq.s32.totalorder %s21, 1
    %p107 = por %p105, %p106
    %p109 = scmp.ne.s32.totalorder %s94, %s108
    %p110 = scmp.eq.s32.totalorder %s21, 0
    %p111 = por %p109, %p110
    %s113 = sadd.s32 %s112, 1
    %p116 = scmp.eq.s32.totalorder %s15, 1
    %p117 = scmp.ne.s32.totalorder %s112, %s114
    %p118 = scmp.eq.s32.totalorder %s15, 0
    %p119 = por %p117, %p118
    %p120 = scmp.ne.s32.totalorder %s112, %s114
    %p121 = scmp.eq.s32.totalorder %s20, 1
    %p122 = por %p120, %p121
    %p123 = scmp.ne.s32.totalorder %s114, %s115
    %p124 = scmp.eq.s32.totalorder %s20, 0
    %p125 = por %p123, %p124
    %p126 = scmp.ne.s32.totalorder %s114, %s115
    %p127 = scmp.eq.s32.totalorder %s21, 1
    %p128 = por %p126, %p127
    %p130 = scmp.ne.s32.totalorder %s115, %s129
    %p131 = scmp.eq.s32.totalorder %s21, 0
    %p132 = por %p130, %p131
    %s134 = sadd.s32 %s133, 1
    %p137 = scmp.eq.s32.totalorder %s15, 1
    %p138 = scmp.ne.s32.totalorder %s133, %s135
    %p139 = scmp.eq.s32.totalorder %s15, 0
    %p140 = por %p138, %p139
    %p141 = scmp.ne.s32.totalorder %s133, %s135
    %p142 = scmp.eq.s32.totalorder %s20, 1
    %p143 = por %p141, %p142
    %p144 = scmp.ne.s32.totalorder %s135, %s136
    %p145 = scmp.eq.s32.totalorder %s20, 0
    %p146 = por %p144, %p145
    %p147 = scmp.ne.s32.totalorder %s135, %s136
    %p148 = scmp.eq.s32.totalorder %s21, 1
    %p149 = por %p147, %p148
    %p151 = scmp.ne.s32.totalorder %s136, %s150
    %p152 = scmp.eq.s32.totalorder %s21, 0
    %p153 = por %p151, %p152
    %s155 = sadd.s32 %s154, 1
    %p158 = scmp.eq.s32.totalorder %s15, 1
    %p159 = scmp.ne.s32.totalorder %s154, %s156
    %p160 = scmp.eq.s32.totalorder %s15, 0
    %p161 = por %p159, %p160
    %p162 = scmp.ne.s32.totalorder %s154, %s156
    %p163 = scmp.eq.s32.totalorder %s20, 1
    %p164 = por %p162, %p163
    %p165 = scmp.ne.s32.totalorder %s156, %s157
    %p166 = scmp.eq.s32.totalorder %s20, 0
    %p167 = por %p165, %p166
    %p168 = scmp.ne.s32.totalorder %s156, %s157
    %p169 = scmp.eq.s32.totalorder %s21, 1
    %p170 = por %p168, %p169
    %p172 = scmp.ne.s32.totalorder %s157, %s171
    %p173 = scmp.eq.s32.totalorder %s21, 0
    %p174 = por %p172, %p173
    %s176 = sadd.s32 %s175, 1
    %p179 = scmp.eq.s32.totalorder %s15, 1
    %p180 = scmp.ne.s32.totalorder %s175, %s177
    %p181 = scmp.eq.s32.totalorder %s15, 0
    %p182 = por %p180, %p181
    %p183 = scmp.ne.s32.totalorder %s175, %s177
    %p184 = scmp.eq.s32.totalorder %s20, 1
    %p185 = por %p183, %p184
    %p186 = scmp.ne.s32.totalorder %s177, %s178
    %p187 = scmp.eq.s32.totalorder %s20, 0
    %p188 = por %p186, %p187
    %p189 = scmp.ne.s32.totalorder %s177, %s178
    %p190 = scmp.eq.s32.totalorder %s21, 1
    %p191 = por %p189, %p190
    %p193 = scmp.ne.s32.totalorder %s178, %s192
    %p194 = scmp.eq.s32.totalorder %s21, 0
    %p195 = por %p193, %p194
    %s197 = sadd.s32 %s196, 1
    %p200 = scmp.eq.s32.totalorder %s15, 1
    %p201 = scmp.ne.s32.totalorder %s196, %s198
    %p202 = scmp.eq.s32.totalorder %s15, 0
    %p203 = por %p201, %p202
    %p204 = scmp.ne.s32.totalorder %s196, %s198
    %p205 = scmp.eq.s32.totalorder %s20, 1
    %p206 = por %p204, %p205
    %p207 = scmp.ne.s32.totalorder %s198, %s199
    %p208 = scmp.eq.s32.totalorder %s20, 0
    %p209 = por %p207, %p208
    %p210 = scmp.ne.s32.totalorder %s198, %s199
    %p211 = scmp.eq.s32.totalorder %s21, 1
    %p212 = por %p210, %p211
    %p214 = scmp.ne.s32.totalorder %s199, %s213
    %p215 = scmp.eq.s32.totalorder %s21, 0
    %p216 = por %p214, %p215
    %s217 = ssub.s32 %s15, %s22
    %p218 = scmp.eq.s32.totalorder %s217, 0
    %s220 = sadd.s32 %s219, 1
    %s221 = scalar_select %p218, %s219, %s220
    %p224 = pneg %p218
    %p225 = scmp.eq.s32.totalorder %s15, 1
    %p226 = por %p224, %p225
    %p227 = scmp.ne.s32.totalorder %s219, %s222
    %p228 = scmp.eq.s32.totalorder %s15, 0
    %p229 = por %p227, %p228
    %p230 = scmp.ne.s32.totalorder %s219, %s222
    %p231 = scmp.eq.s32.totalorder %s20, 1
    %p232 = por %p230, %p231
    %p233 = scmp.ne.s32.totalorder %s222, %s223
    %p234 = scmp.eq.s32.totalorder %s20, 0
    %p235 = por %p233, %p234
    %p236 = scmp.ne.s32.totalorder %s222, %s223
    %p237 = scmp.eq.s32.totalorder %s21, 1
    %p238 = por %p236, %p237
    %p240 = scmp.ne.s32.totalorder %s223, %s239
    %p241 = scmp.eq.s32.totalorder %s21, 0
    %p242 = por %p240, %p241
    %p243 = scmp.le.s32.totalorder 1, %s15
    %p244 = scmp.lt.s32.totalorder %s15, 3
    %p245 = pnand %p243, %p244
    %p246 = pneg %p245
    // Predicated region
    $region9: #{fwd.1} parent=5 // pred_check
      _
    $region10: #{fwd.1} parent=5 // pred_check_branch
      %248 = sbr.rel (%p245) target = $region12
    $region11: #{fwd.1} parent=5 // pred_region
      %s249 = ssub.s32 %s15, 1
      // Predicated region
      $region13: #{fwd.1} parent=11 // pred_check
        %p250 = pneg %p62
      $region14: #{fwd.1} parent=11 // pred_check_branch
        %252 = sbr.rel (%p250) target = $region16
      $region15: #{fwd.1} parent=11 // pred_region
        _
      $region16: #{fwd.1} parent=11 // pred_fallthru
        _
      // Predicated region
      $region17: #{fwd.1} parent=11 // pred_check
        %p253 = pneg %p83
      $region18: #{fwd.1} parent=11 // pred_check_branch
        %255 = sbr.rel (%p253) target = $region20
      $region19: #{fwd.1} parent=11 // pred_region
        _
      $region20: #{fwd.1} parent=11 // pred_fallthru
        _
      // Predicated region
      $region21: #{fwd.1} parent=11 // pred_check
        %p256 = pneg %p104
      $region22: #{fwd.1} parent=11 // pred_check_branch
        %258 = sbr.rel (%p256) target = $region24
      $region23: #{fwd.1} parent=11 // pred_region
        _
      $region24: #{fwd.1} parent=11 // pred_fallthru
        _
      // Predicated region
      $region25: #{fwd.1} parent=11 // pred_check
        %p259 = pneg %p125
      $region26: #{fwd.1} parent=11 // pred_check_branch
        %261 = sbr.rel (%p259) target = $region28
      $region27: #{fwd.1} parent=11 // pred_region
        _
      $region28: #{fwd.1} parent=11 // pred_fallthru
        _
      // Predicated region
      $region29: #{fwd.1} parent=11 // pred_check
        %p262 = pneg %p146
      $region30: #{fwd.1} parent=11 // pred_check_branch
        %264 = sbr.rel (%p262) target = $region32
      $region31: #{fwd.1} parent=11 // pred_region
        _
      $region32: #{fwd.1} parent=11 // pred_fallthru
        _
      // Predicated region
      $region33: #{fwd.1} parent=11 // pred_check
        %p265 = pneg %p167
      $region34: #{fwd.1} parent=11 // pred_check_branch
        %267 = sbr.rel (%p265) target = $region36
      $region35: #{fwd.1} parent=11 // pred_region
        _
      $region36: #{fwd.1} parent=11 // pred_fallthru
        _
      // Predicated region
      $region37: #{fwd.1} parent=11 // pred_check
        %p268 = pneg %p188
      $region38: #{fwd.1} parent=11 // pred_check_branch
        %270 = sbr.rel (%p268) target = $region40
      $region39: #{fwd.1} parent=11 // pred_region
        _
      $region40: #{fwd.1} parent=11 // pred_fallthru
        _
      // Predicated region
      $region41: #{fwd.1} parent=11 // pred_check
        %p271 = pneg %p209
      $region42: #{fwd.1} parent=11 // pred_check_branch
        %273 = sbr.rel (%p271) target = $region44
      $region43: #{fwd.1} parent=11 // pred_region
        _
      $region44: #{fwd.1} parent=11 // pred_fallthru
        _
    $region12: #{fwd.1} parent=5 // pred_fallthru
      _
    %p274 = scmp.lt.s32.totalorder %s15, 2
    // Predicated region
    $region45: #{fwd.1} parent=5 // pred_check
      %p275 = pneg %p274
    $region46: #{fwd.1} parent=5 // pred_check_branch
      %277 = sbr.rel (%p275) target = $region48
    $region47: #{fwd.1} parent=5 // pred_region
      // Predicated region
      $region49: #{fwd.1} parent=47 // pred_check
        %p278 = pneg %p35
      $region50: #{fwd.1} parent=47 // pred_check_branch
        %280 = sbr.rel (%p278) target = $region52
      $region51: #{fwd.1} parent=47 // pred_region
        %p281 = scmp.lt.s32.totalorder %s15, 1
        %s282 = scalar_select %p281, %s15, 1
        %s283 = smul.addr %s282, 2
        %s284 = smul.addr %s283, 4
        %s285 = scalar_lea.vmem %s0, %s284
      $region52: #{fwd.1} parent=47 // pred_fallthru
        _
    $region48: #{fwd.1} parent=5 // pred_fallthru
      _
    %p286 = scmp.le.s32.totalorder 1, %s15
    %p287 = scmp.lt.s32.totalorder %s15, 3
    %p288 = pnand %p286, %p287
    %p289 = pneg %p288
    // Predicated region
    $region53: #{fwd.1} parent=5 // pred_check
      _
    $region54: #{fwd.1} parent=5 // pred_check_branch
      %291 = sbr.rel (%p288) target = $region56
    $region55: #{fwd.1} parent=5 // pred_region
      %s292 = ssub.s32 %s15, 1
      %p293 = scmp.lt.s32.totalorder %s20, 1
      %s294 = scalar_select %p293, %s20, 1
      %s295 = smul.addr %s294, 2
      %s296 = smul.addr %s295, 4
      %s297 = scalar_lea.vmem %s0, %s296
      %p298 = pneg %p41
      %p299 = pneg %p38
      %p300 = pneg %p62
      %p301 = pneg %p59
      %p302 = pneg %p83
      %p303 = pneg %p80
      %p304 = pneg %p104
      %p305 = pneg %p101
      %p306 = pneg %p125
      %p307 = pneg %p122
      %p308 = pneg %p146
      %p309 = pneg %p143
      %p310 = pneg %p167
      %p311 = pneg %p164
      %p312 = pneg %p188
      %p313 = pneg %p185
      %p314 = pneg %p209
      %p315 = pneg %p206
      %p316 = pneg %p235
      %p317 = pneg %p232
      %p318 = scmp.lt.s32.totalorder %s20, 1
      %s319 = scalar_select %p318, %s20, 1
      %s320 = smul.addr %s319, 2
      %s321 = smul.addr %s320, 8
      %s322 = scalar_lea.vmem %s9, %s321
      %p323 = scmp.lt.s32.totalorder %s20, 1
      %s324 = scalar_select %p323, %s20, 1
      %s325 = smul.addr %s324, 2
      %s326 = smul.addr %s325, 4
      %s327 = scalar_lea.vmem %s0, %s326
      %p328 = scmp.lt.s32.totalorder %s20, 1
      %s329 = scalar_select %p328, %s20, 1
      %s330 = smul.addr %s329, 2
      %s331 = smul.addr %s330, 8
      %s332 = scalar_lea.vmem %s9, %s331
      %v334 = vld [vmem:[%s327] sm:$0xff]
      %v335 = vld [vmem:[%s1] sm:$0xf]
      %v336 = vld [vmem:[%s1 + $0x4] sm:$0xf]
      %v337 = vld [vmem:[%s1 + $0x8] sm:$0xf]
      %v338 = vld [vmem:[%s1 + $0xc] sm:$0xf]
      %v339 = vld [vmem:[%s1 + $0x10] sm:$0xf]
      %v340 = vld [vmem:[%s1 + $0x14] sm:$0xf]
      %v341 = vld [vmem:[%s1 + $0x18] sm:$0xf]
      %v342 = vld [vmem:[%s1 + $0x1c] sm:$0xf]
      %v343 = vld [vmem:[%s1 + $0x20] sm:$0xf]
      %v344 = vld [vmem:[%s1 + $0x24] sm:$0xf]
      %v345 = vld [vmem:[%s1 + $0x28] sm:$0xf]
      %v346 = vld [vmem:[%s1 + $0x2c] sm:$0xf]
      %v347 = vld [vmem:[%s1 + $0x30] sm:$0xf]
      %v348 = vld [vmem:[%s1 + $0x34] sm:$0xf]
      %v349 = vld [vmem:[%s1 + $0x38] sm:$0xf]
      %v350 = vld [vmem:[%s1 + $0x3c] sm:$0xf]
      %v351 = vld [vmem:[%s1 + $0x40] sm:$0xf]
      %v352 = vld [vmem:[%s1 + $0x44] sm:$0xf]
      %v353 = vld [vmem:[%s1 + $0x48] sm:$0xf]
      %v354 = vld [vmem:[%s1 + $0x4c] sm:$0xf]
      %v355 = vld [vmem:[%s1 + $0x50] sm:$0xf]
      %v356 = vld [vmem:[%s1 + $0x54] sm:$0xf]
      %v357 = vld [vmem:[%s1 + $0x58] sm:$0xf]
      %v358 = vld [vmem:[%s1 + $0x5c] sm:$0xf]
      %v359 = vld [vmem:[%s1 + $0x60] sm:$0xf]
      %v360 = vld [vmem:[%s1 + $0x64] sm:$0xf]
      %v361 = vld [vmem:[%s1 + $0x68] sm:$0xf]
      %v362 = vld [vmem:[%s1 + $0x6c] sm:$0xf]
      %v363 = vld [vmem:[%s1 + $0x70] sm:$0xf]
      %v364 = vld [vmem:[%s1 + $0x74] sm:$0xf]
      %v365 = vld [vmem:[%s1 + $0x78] sm:$0xf]
      %v366 = vld [vmem:[%s1 + $0x7c] sm:$0xf]
      %v368 = vunpack.c.l.b16 %v334
      %v369 = vunpack.c.h.b16 %v334
      %v370 = vpack.c.b16 %v368, %v368
      %v371 = vpack.c.b16 %v369, %v369
      %v406 = vunpack.c.l.b16 %v335
      %v407 = vunpack.c.l.b16 %v336
      %v408 = vunpack.c.l.b16 %v337
      %v409 = vunpack.c.l.b16 %v338
      %v410 = vunpack.c.l.b16 %v339
      %v411 = vunpack.c.l.b16 %v340
      %v412 = vunpack.c.l.b16 %v341
      %v413 = vunpack.c.l.b16 %v342
      %v414 = vunpack.c.l.b16 %v343
      %v415 = vunpack.c.l.b16 %v344
      %v416 = vunpack.c.l.b16 %v345
      %v417 = vunpack.c.l.b16 %v346
      %v418 = vunpack.c.l.b16 %v347
      %v419 = vunpack.c.l.b16 %v348
      %v420 = vunpack.c.l.b16 %v349
      %v421 = vunpack.c.l.b16 %v350
      %v422 = vunpack.c.l.b16 %v351
      %v423 = vunpack.c.l.b16 %v352
      %v424 = vunpack.c.l.b16 %v353
      %v425 = vunpack.c.l.b16 %v354
      %v426 = vunpack.c.l.b16 %v355
      %v427 = vunpack.c.l.b16 %v356
      %v428 = vunpack.c.l.b16 %v357
      %v429 = vunpack.c.l.b16 %v358
      %v430 = vunpack.c.l.b16 %v359
      %v431 = vunpack.c.l.b16 %v360
      %v432 = vunpack.c.l.b16 %v361
      %v433 = vunpack.c.l.b16 %v362
      %v434 = vunpack.c.l.b16 %v363
      %v435 = vunpack.c.l.b16 %v364
      %v436 = vunpack.c.l.b16 %v365
      %v437 = vunpack.c.l.b16 %v366
      %v438 = vpack.c.b16 %v407, %v406
      %v439 = vpack.c.b16 %v409, %v408
      %v440 = vpack.c.b16 %v411, %v410
      %v441 = vpack.c.b16 %v413, %v412
      %v442 = vpack.c.b16 %v415, %v414
      %v443 = vpack.c.b16 %v417, %v416
      %v444 = vpack.c.b16 %v419, %v418
      %v445 = vpack.c.b16 %v421, %v420
      %v446 = vpack.c.b16 %v423, %v422
      %v447 = vpack.c.b16 %v425, %v424
      %v448 = vpack.c.b16 %v427, %v426
      %v449 = vpack.c.b16 %v429, %v428
      %v450 = vpack.c.b16 %v431, %v430
      %v451 = vpack.c.b16 %v433, %v432
      %v452 = vpack.c.b16 %v435, %v434
      %v453 = vpack.c.b16 %v437, %v436
      %470 = vmatpush.bf16.msra.mxu0 %v445
      %471 = vmatpush.bf16.msra.mxu0 %v444
      %472 = vmatpush.bf16.msra.mxu0 %v443
      %473 = vmatpush.bf16.msra.mxu0 %v442
      %474 = vmatpush.bf16.msra.mxu0 %v441
      %475 = vmatpush.bf16.msra.mxu0 %v440
      %476 = vmatpush.bf16.msra.mxu0 %v439
      %477 = vmatpush.bf16.msra.mxu0 %v438
      %478 = vmatmul.bf16.gmra.mxu0 %v370
      %v479 = vpop.f32.mrf.mxu0
      %v480 = vadd.f32 0.0, %v479
      %v481 = vpop.f32.mrf.mxu0
      %482 = vdwg.mxu0
      %483 = vmatpush.bf16.msra.mxu0 %v453
      %484 = vmatpush.bf16.msra.mxu0 %v452
      %485 = vmatpush.bf16.msra.mxu0 %v451
      %486 = vmatpush.bf16.msra.mxu0 %v450
      %487 = vmatpush.bf16.msra.mxu0 %v449
      %488 = vmatpush.bf16.msra.mxu0 %v448
      %489 = vmatpush.bf16.msra.mxu0 %v447
      %490 = vmatpush.bf16.msra.mxu0 %v446
      %491 = vmatmul.bf16.gmra.mxu0 %v371
      %v492 = vpop.f32.mrf.mxu0
      %v493 = vadd.f32 %v480, %v492
      %v494 = vpop.f32.mrf.mxu0
      %495 = vdwg.mxu0
      %v496 = vld [vmem:[%s3] sm:$0xf]
      %v497 = vld [vmem:[%s3 + $0x4] sm:$0xf]
      %v498 = vld [vmem:[%s3 + $0x8] sm:$0xf]
      %v499 = vpack.c.bf16 %v493, %v493
      %v500 = vld [vmem:[%s4] sm:$0xff]
      %v501 = vld [vmem:[%s4 + $0x8] sm:$0xff]
      %v502 = vld [vmem:[%s4 + $0x10] sm:$0xff]
      %504 = vset.pattern.permute.xlu0 0
      %505 = vperm.xlu0 %504, %v500
      %v506 = vpop.permute.xlu0 %505
      %509 = vset.pattern.permute.xlu0 0
      %510 = vperm.xlu0 %509, %v501
      %v511 = vpop.permute.xlu0 %510
      %514 = vset.pattern.permute.xlu0 0
      %515 = vperm.xlu0 %514, %v502
      %v516 = vpop.permute.xlu0 %515
      %v521 = vunpack.c.l.b16 %v496
      %v522 = vunpack.c.l.b16 %v497
      %v523 = vunpack.c.l.b16 %v498
      %v524 = vpack.c.b16 %v522, %v521
      %v525 = vpack.c.b16 %v523, %v523
      %vm526 = vcmask 64512
      %v528 = vsel %vm526, %v524, 0
      %v531 = vsel %vm526, %v525, 0
      %vm533 = vcmask 1043456
      %v535 = vsel %vm533, %v499, 0
      %537 = vmatpush.bf16.msra.mxu0 0
      %538 = vmatpush.bf16.msra.mxu0 0
      %539 = vmatpush.bf16.msra.mxu0 0
      %540 = vmatpush.bf16.msra.mxu0 0
      %541 = vmatpush.bf16.msra.mxu0 0
      %542 = vmatpush.bf16.msra.mxu0 0
      %543 = vmatpush.bf16.msra.mxu0 0
      %544 = vmatpush.bf16.msra.mxu0 %v535
      %545 = vmatmul.bf16.gmra.mxu0 %v528
      %v546 = vpop.f32.mrf.mxu0
      %v547 = vadd.f32 %v506, %v546
      %v548 = vpop.f32.mrf.mxu0
      %v549 = vadd.f32 %v511, %v548
      %550 = vmatmul.bf16.gmra.mxu0 %v531
      %v551 = vpop.f32.mrf.mxu0
      %v552 = vadd.f32 %v516, %v551
      %v553 = vpop.f32.mrf.mxu0
      %554 = vdwg.mxu0
      %v555 = vmax.f32 %v547, 0.0
      %v556 = vmax.f32 %v549, 0.0
      %v557 = vmax.f32 %v552, 0.0
      %v558 = vld [vmem:[%s5] sm:$0x1]
      %v560 = vperm.slane %v558, 0
      %v562 = vmul.f32 %v555, %v560
      %s563 = scalar_lea.vmem %s5, 1
      %v564 = vld [vmem:[%s563] sm:$0x1]
      %v566 = vperm.slane %v564, 0
      %v568 = vmul.f32 %v556, %v566
      %v569 = vadd.f32 %v562, %v568
      %s570 = scalar_lea.vmem %s5, 2
      %v571 = vld [vmem:[%s570] sm:$0x1]
      %v573 = vperm.slane %v571, 0
      %v575 = vmul.f32 %v557, %v573
      %v576 = vadd.f32 %v569, %v575
      %v577 = vpack.c.bf16 %v576, %v576
      %v578 = vld [vmem:[%s2] sm:$0xff]
      %v579 = vld [vmem:[%s2 + $0x8] sm:$0xff]
      %v580 = vld [vmem:[%s2 + $0x10] sm:$0xff]
      %v581 = vld [vmem:[%s2 + $0x18] sm:$0xff]
      %v582 = vld [vmem:[%s2 + $0x20] sm:$0xff]
      %v583 = vld [vmem:[%s2 + $0x28] sm:$0xff]
      %v584 = vld [vmem:[%s2 + $0x30] sm:$0xff]
      %v585 = vld [vmem:[%s2 + $0x38] sm:$0xff]
      %v586 = vld [vmem:[%s2 + $0x40] sm:$0xff]
      %v587 = vld [vmem:[%s2 + $0x48] sm:$0xff]
      %v588 = vld [vmem:[%s2 + $0x50] sm:$0x33]
      %v600 = vunpack.c.l.b16 %v578
      %v601 = vunpack.c.h.b16 %v578
      %v602 = vunpack.c.l.b16 %v579
      %v603 = vunpack.c.h.b16 %v579
      %v604 = vunpack.c.l.b16 %v580
      %v605 = vunpack.c.h.b16 %v580
      %v606 = vunpack.c.l.b16 %v581
      %v607 = vunpack.c.h.b16 %v581
      %v608 = vunpack.c.l.b16 %v582
      %v609 = vunpack.c.h.b16 %v582
      %v610 = vunpack.c.l.b16 %v583
      %v611 = vunpack.c.h.b16 %v583
      %v612 = vunpack.c.l.b16 %v584
      %v613 = vunpack.c.h.b16 %v584
      %v614 = vunpack.c.l.b16 %v585
      %v615 = vunpack.c.h.b16 %v585
      %v616 = vunpack.c.l.b16 %v586
      %v617 = vunpack.c.h.b16 %v586
      %v618 = vunpack.c.l.b16 %v587
      %v619 = vunpack.c.h.b16 %v587
      %v620 = vunpack.c.l.b16 %v588
      %v621 = vunpack.c.h.b16 %v588
      %v622 = vpack.c.b16 %v602, %v600
      %v623 = vpack.c.b16 %v603, %v601
      %v624 = vpack.c.b16 %v606, %v604
      %v625 = vpack.c.b16 %v607, %v605
      %v626 = vpack.c.b16 %v610, %v608
      %v627 = vpack.c.b16 %v611, %v609
      %v628 = vpack.c.b16 %v614, %v612
      %v629 = vpack.c.b16 %v615, %v613
      %v630 = vpack.c.b16 %v618, %v616
      %v631 = vpack.c.b16 %v619, %v617
      %v632 = vpack.c.b16 %v620, %v620
      %v633 = vpack.c.b16 %v621, %v621
      %vm644 = vcmask 687104
      %v646 = vsel %vm644, %v577, 0
      %vm648 = vcmask 1041408
      %v650 = vsel %vm648, %v632, 0
      %v653 = vsel %vm648, %v633, 0
      %655 = vmatpush.bf16.msra.mxu0 0
      %656 = vmatpush.bf16.msra.mxu0 0
      %657 = vmatpush.bf16.msra.mxu0 %v650
      %658 = vmatpush.bf16.msra.mxu0 %v630
      %659 = vmatpush.bf16.msra.mxu0 %v628
      %660 = vmatpush.bf16.msra.mxu0 %v626
      %661 = vmatpush.bf16.msra.mxu0 %v624
      %662 = vmatpush.bf16.msra.mxu0 %v622
      %663 = vmatmul.bf16.gmra.mxu0 %v646
      %v664 = vpop.f32.mrf.mxu0
      %v665 = vadd.f32 0.0, %v664
      %v666 = vpop.f32.mrf.mxu0
      %667 = vdwg.mxu0
      %668 = vmatpush.bf16.msra.mxu0 0
      %669 = vmatpush.bf16.msra.mxu0 0
      %670 = vmatpush.bf16.msra.mxu0 %v653
      %671 = vmatpush.bf16.msra.mxu0 %v631
      %672 = vmatpush.bf16.msra.mxu0 %v629
      %673 = vmatpush.bf16.msra.mxu0 %v627
      %674 = vmatpush.bf16.msra.mxu0 %v625
      %675 = vmatpush.bf16.msra.mxu0 %v623
      %676 = vmatmul.bf16.gmra.mxu0 %v646
      %v677 = vpop.f32.mrf.mxu0
      %v678 = vadd.f32 0.0, %v677
      %v679 = vpop.f32.mrf.mxu0
      %680 = vdwg.mxu0
      %681 = vrot.lane.b32.xlu0 %v665, 17
      %v682 = vpop.permute.xlu0 %681
      %683 = vrot.lane.b32.xlu0 %v678, 17
      %v684 = vpop.permute.xlu0 %683
      %v685 = vlaneseq
      %v686 = vand.u32 %v685, 127
      %vm687 = vcmp.lt.s32.totalorder %v686, 17
      %v688 = vsel %vm687, %v682, %v684
      %v689 = vsel %vm687, %v684, %v682
      %v690 = vld [vmem:[%s8] sm:$0x3]
      %v692 = vperm.slane %v690, 0
      %v693 = vperm.slane %v690, 1
      %v696 = vmul.f32 %v689, %v692
      %v697 = vmul.f32 %v688, %v693
      %698 = vrot.lane.b32.xlu0 %v665, 16
      %v699 = vpop.permute.xlu0 %698
      %700 = vrot.lane.b32.xlu0 %v678, 16
      %v701 = vpop.permute.xlu0 %700
      %vm702 = vcmp.lt.s32.totalorder %v686, 16
      %v703 = vsel %vm702, %v699, %v701
      %v704 = vsel %vm702, %v701, %v699
      %s705 = scalar_lea.vmem %s8, 2
      %v706 = vld [vmem:[%s705] sm:$0x3]
      %v708 = vperm.slane %v706, 0
      %v709 = vperm.slane %v706, 1
      %v712 = vmul.f32 %v704, %v708
      %v713 = vmul.f32 %v703, %v709
      %714 = vrot.lane.b32.xlu0 %v665, 15
      %v715 = vpop.permute.xlu0 %714
      %716 = vrot.lane.b32.xlu0 %v678, 15
      %v717 = vpop.permute.xlu0 %716
      %vm718 = vcmp.lt.s32.totalorder %v686, 15
      %v719 = vsel %vm718, %v715, %v717
      %v720 = vsel %vm718, %v717, %v715
      %s721 = scalar_lea.vmem %s8, 4
      %v722 = vld [vmem:[%s721] sm:$0x3]
      %v724 = vperm.slane %v722, 0
      %v725 = vperm.slane %v722, 1
      %v728 = vmul.f32 %v720, %v724
      %v729 = vmul.f32 %v719, %v725
      %730 = vrot.lane.b32.xlu0 %v665, 1
      %v731 = vpop.permute.xlu0 %730
      %732 = vrot.lane.b32.xlu0 %v678, 1
      %v733 = vpop.permute.xlu0 %732
      %vm734 = vcmp.lt.s32.totalorder %v686, 1
      %v735 = vsel %vm734, %v731, %v733
      %v736 = vsel %vm734, %v733, %v731
      %s737 = scalar_lea.vmem %s8, 6
      %v738 = vld [vmem:[%s737] sm:$0x3]
      %v740 = vperm.slane %v738, 0
      %v741 = vperm.slane %v738, 1
      %v744 = vmul.f32 %v736, %v740
      %v745 = vmul.f32 %v735, %v741
      %s746 = scalar_lea.vmem %s8, 8
      %v747 = vld [vmem:[%s746] sm:$0x3]
      %v749 = vperm.slane %v747, 0
      %v750 = vperm.slane %v747, 1
      %v753 = vmul.f32 %v665, %v749
      %v754 = vmul.f32 %v678, %v750
      %755 = vrot.lane.b32.xlu0 %v665, 127
      %v756 = vpop.permute.xlu0 %755
      %757 = vrot.lane.b32.xlu0 %v678, 127
      %v758 = vpop.permute.xlu0 %757
      %vm759 = vcmp.lt.s32.totalorder %v686, 127
      %v760 = vsel %vm759, %v756, %v758
      %v761 = vsel %vm759, %v758, %v756
      %s762 = scalar_lea.vmem %s8, 10
      %v763 = vld [vmem:[%s762] sm:$0x3]
      %v765 = vperm.slane %v763, 0
      %v766 = vperm.slane %v763, 1
      %v769 = vmul.f32 %v760, %v765
      %v770 = vmul.f32 %v761, %v766
      %771 = vrot.lane.b32.xlu0 %v665, 113
      %v772 = vpop.permute.xlu0 %771
      %773 = vrot.lane.b32.xlu0 %v678, 113
      %v774 = vpop.permute.xlu0 %773
      %vm775 = vcmp.lt.s32.totalorder %v686, 113
      %v776 = vsel %vm775, %v772, %v774
      %v777 = vsel %vm775, %v774, %v772
      %s778 = scalar_lea.vmem %s8, 12
      %v779 = vld [vmem:[%s778] sm:$0x3]
      %v781 = vperm.slane %v779, 0
      %v782 = vperm.slane %v779, 1
      %v785 = vmul.f32 %v776, %v781
      %v786 = vmul.f32 %v777, %v782
      %787 = vrot.lane.b32.xlu0 %v665, 112
      %v788 = vpop.permute.xlu0 %787
      %789 = vrot.lane.b32.xlu0 %v678, 112
      %v790 = vpop.permute.xlu0 %789
      %vm791 = vcmp.lt.s32.totalorder %v686, 112
      %v792 = vsel %vm791, %v788, %v790
      %v793 = vsel %vm791, %v790, %v788
      %s794 = scalar_lea.vmem %s8, 14
      %v795 = vld [vmem:[%s794] sm:$0x3]
      %v797 = vperm.slane %v795, 0
      %v798 = vperm.slane %v795, 1
      %v801 = vmul.f32 %v792, %v797
      %v802 = vmul.f32 %v793, %v798
      %803 = vrot.lane.b32.xlu0 %v665, 111
      %v804 = vpop.permute.xlu0 %803
      %805 = vrot.lane.b32.xlu0 %v678, 111
      %v806 = vpop.permute.xlu0 %805
      %vm807 = vcmp.lt.s32.totalorder %v686, 111
      %v808 = vsel %vm807, %v804, %v806
      %v809 = vsel %vm807, %v806, %v804
      %s810 = scalar_lea.vmem %s8, 16
      %v811 = vld [vmem:[%s810] sm:$0x3]
      %v813 = vperm.slane %v811, 0
      %v814 = vperm.slane %v811, 1
      %v817 = vmul.f32 %v808, %v813
      %v818 = vmul.f32 %v809, %v814
      %v819 = vpack.c.bf16 %v712, %v696
      %v820 = vpack.c.bf16 %v713, %v697
      %v821 = vpack.c.bf16 %v744, %v728
      %v822 = vpack.c.bf16 %v745, %v729
      %v823 = vpack.c.bf16 %v769, %v753
      %v824 = vpack.c.bf16 %v770, %v754
      %v825 = vpack.c.bf16 %v801, %v785
      %v826 = vpack.c.bf16 %v802, %v786
      %v827 = vpack.c.bf16 %v817, %v817
      %v828 = vpack.c.bf16 %v818, %v818
      %v829 = vld [vmem:[%s6] sm:$0xf]
      %v830 = vld [vmem:[%s7] sm:$0xff]
      %832 = vset.pattern.permute.xlu0 0
      %833 = vperm.xlu0 %832, %v830
      %v834 = vpop.permute.xlu0 %833
      %vm836 = vcmask 588800
      %v838 = vsel %vm836, %v829, 0
      %v841 = vsel %vm533, %v827, 0
      %v844 = vsel %vm533, %v828, 0
      %846 = vmatpush.bf16.msra.mxu0 0
      %847 = vmatpush.bf16.msra.mxu0 0
      %848 = vmatpush.bf16.msra.mxu0 0
      %849 = vmatpush.bf16.msra.mxu0 %v841
      %850 = vmatpush.bf16.msra.mxu0 %v825
      %851 = vmatpush.bf16.msra.mxu0 %v823
      %852 = vmatpush.bf16.msra.mxu0 %v821
      %853 = vmatpush.bf16.msra.mxu0 %v819
      %854 = vmatmul.bf16.gmra.mxu0 %v838
      %v855 = vpop.f32.mrf.mxu0
      %v856 = vadd.f32 %v834, %v855
      %v857 = vpop.f32.mrf.mxu0
      %858 = vdwg.mxu0
      %859 = vmatpush.bf16.msra.mxu0 0
      %860 = vmatpush.bf16.msra.mxu0 0
      %861 = vmatpush.bf16.msra.mxu0 0
      %862 = vmatpush.bf16.msra.mxu0 %v844
      %863 = vmatpush.bf16.msra.mxu0 %v826
      %864 = vmatpush.bf16.msra.mxu0 %v824
      %865 = vmatpush.bf16.msra.mxu0 %v822
      %866 = vmatpush.bf16.msra.mxu0 %v820
      %867 = vmatmul.bf16.gmra.mxu0 %v838
      %v868 = vpop.f32.mrf.mxu0
      %v869 = vadd.f32 %v834, %v868
      %v870 = vpop.f32.mrf.mxu0
      %871 = vdwg.mxu0
      %v872 = vmax.f32 %v856, 0.0
      %v873 = vmax.f32 %v869, 0.0
      %874 = vst [vmem:[%s332] sm:$0xff] %v872
      %875 = vst [vmem:[%s332 + $0x8] sm:$0xff] %v873
      %p876 = scmp.lt.s32.totalorder %s20, 1
      %s877 = scalar_select %p876, %s20, 1
      %s878 = smul.addr %s877, 2
      %s879 = smul.addr %s878, 8
      %s880 = scalar_lea.vmem %s9, %s879
      // Predicated region
      $region57: #{fwd.1} parent=55 // pred_check
        %p881 = pneg %p232
      $region58: #{fwd.1} parent=55 // pred_check_branch
        %883 = sbr.rel (%p881) target = $region60
      $region59: #{fwd.1} parent=55 // pred_region
        _
      $region60: #{fwd.1} parent=55 // pred_fallthru
        _
    $region56: #{fwd.1} parent=5 // pred_fallthru
      _
    %p884 = scmp.le.s32.totalorder 2, %s15
    // Predicated region
    $region61: #{fwd.1} parent=5 // pred_check
      %p885 = pneg %p884
    $region62: #{fwd.1} parent=5 // pred_check_branch
      %887 = sbr.rel (%p885) target = $region64
    $region63: #{fwd.1} parent=5 // pred_region
      %s888 = ssub.s32 %s15, 2
      // Predicated region
      $region65: #{fwd.1} parent=63 // pred_check
        %p889 = pneg %p238
      $region66: #{fwd.1} parent=63 // pred_check_branch
        %891 = sbr.rel (%p889) target = $region68
      $region67: #{fwd.1} parent=63 // pred_region
        %p892 = scmp.lt.s32.totalorder %s21, 1
        %s893 = scalar_select %p892, %s21, 1
        %s894 = smul.addr %s893, 2
        %s895 = smul.addr %s894, 8
        %s896 = scalar_lea.vmem %s9, %s895
      $region68: #{fwd.1} parent=63 // pred_fallthru
        _
    $region64: #{fwd.1} parent=5 // pred_fallthru
      _
  $region6: #{fwd.1} parent=0 // loop_footer
    %s19 = sadd.s32 1, %s15
  $region7: #{fwd.1} parent=0 // loop_footer_branch
    %14 = sbr.rel target = $region3
  $region8: #{fwd.1} parent=0 // loop_exit
    _

</llo_original>
